<compile_context>
chip_gen: v5e
topology: v5e:2x2
jax: 0.10.0
libtpu: 0.0.40
codegen_flags: <defaults>
</compile_context>

<pallas_src>
import functools

import jax
import jax.numpy as jnp
from jax.experimental import pallas as pl
from jax.experimental.pallas import tpu as pltpu

_LANE = 128


def _round_up(n, m):
    return ((n + m - 1) // m) * m


def _mlp_kernel(x_ref, w1_ref, b1_ref, w2_ref, b2_ref, w3_ref, b3_ref, o_ref,
                *, activation, output_activation, matmul_dtype):
    """Fused MLP forward for one batch tile.

    x_ref : (TB, D_in)        VMEM (D_in unpadded)
    w1    : (D_in, H1_p)      b1: (1, H1_p)   (weights pre-cast to matmul_dtype)
    w2    : (H1_p, H2_p)      b2: (1, H2_p)
    w3    : (H2_p, D_out)     b3: (1, D_out)  (D_out unpadded)
    o_ref : (TB, D_out)
    """
    def act(v):
        if activation == "relu":
            return jnp.maximum(v, 0.0)
        elif activation == "tanh":
            return jnp.tanh(v)
        elif activation == "gelu":
            return jax.nn.gelu(v)
        else:
            raise ValueError(f"Unsupported activation: {activation}")

    def mm(a, w_ref):
        # Weights already in matmul_dtype; only activations cast here.
        # Accumulation is always f32 on the MXU.
        return jnp.dot(a.astype(matmul_dtype), w_ref[...],
                       preferred_element_type=jnp.float32)

    x = x_ref[...]

    h1 = act(mm(x, w1_ref) + b1_ref[...])     # dropout == identity (eval mode)
    h2 = act(mm(h1, w2_ref) + b2_ref[...])
    out = mm(h2, w3_ref) + b3_ref[...]

    if output_activation == "sigmoid":
        out = jax.nn.sigmoid(out)
    elif output_activation == "softmax":
        # D_out is not lane-padded, so a plain last-axis softmax is exact.
        out = jax.nn.softmax(out, axis=-1)
    # else: no final activation

    o_ref[...] = out.astype(o_ref.dtype)


def mlp_classifier_forward(x, params, *, activation="relu",
                           output_activation=None,
                           matmul_dtype=jnp.bfloat16):
    """Run the fused Pallas MLP kernel.

    x      : (B, D_in) float32
    params : dict with w1 (D_in,H1), b1 (H1,), w2 (H1,H2), b2 (H2,),
             w3 (H2,D_out), b3 (D_out,)  (weights already (in, out))
    matmul_dtype : dtype of MXU operands (jnp.bfloat16 default, or jnp.float32).
    """
    B, D_in = x.shape
    w1, b1 = params["w1"], params["b1"]
    w2, b2 = params["w2"], params["b2"]
    w3, b3 = params["w3"], params["b3"]
    H1, H2, D_out = w1.shape[1], w2.shape[1], w3.shape[1]

    # Hidden dims padded to lane multiples (exact: act(0)=0, padded weight
    # rows of the following layer are 0).  D_in / D_out stay unpadded.
    H1_p = _round_up(H1, _LANE)
    H2_p = _round_up(H2, _LANE)

    # ---- batch tiling -------------------------------------------------------
    sub = 16 if matmul_dtype == jnp.bfloat16 else 8
    if B <= 256:
        # Single grid step: no per-step pipeline overhead for small batches.
        batch_tile = _round_up(B, sub)
    else:
        # >= 2 grid steps so both v7x TensorCores get work; cap the tile at
        # 1024 rows so the ~0.35us per-step overhead is negligible vs compute
        # while staying far below VMEM limits.
        batch_tile = min(1024, _round_up(pl.cdiv(B, 2), sub))
    B_p = _round_up(B, batch_tile)
    grid = (B_p // batch_tile,)

    x_p = jnp.pad(x, ((0, B_p - B), (0, 0)))
    # Pre-cast weights to the MXU operand dtype (halves weight DMA / VMEM and
    # removes the per-tile cast of ~230k weight elements).
    w1_p = jnp.pad(w1, ((0, 0), (0, H1_p - H1))).astype(matmul_dtype)
    w2_p = jnp.pad(w2, ((0, H1_p - H1), (0, H2_p - H2))).astype(matmul_dtype)
    w3_p = jnp.pad(w3, ((0, H2_p - H2), (0, 0))).astype(matmul_dtype)
    b1_p = jnp.pad(b1, ((0, H1_p - H1),)).reshape(1, H1_p).astype(jnp.float32)
    b2_p = jnp.pad(b2, ((0, H2_p - H2),)).reshape(1, H2_p).astype(jnp.float32)
    b3_p = b3.reshape(1, D_out).astype(jnp.float32)

    kernel = functools.partial(_mlp_kernel,
                               activation=activation,
                               output_activation=output_activation,
                               matmul_dtype=matmul_dtype)

    dim_sem = ("parallel",) if grid[0] > 1 else ("arbitrary",)

    out_p = pl.pallas_call(
        kernel,
        out_shape=jax.ShapeDtypeStruct((B_p, D_out), jnp.float32),
        grid_spec=pl.GridSpec(
            grid=grid,
            in_specs=[
                pl.BlockSpec((batch_tile, D_in), lambda i: (i, 0)),  # x tile
                pl.BlockSpec((D_in, H1_p), lambda i: (0, 0)),        # w1 (resident)
                pl.BlockSpec((1, H1_p), lambda i: (0, 0)),           # b1
                pl.BlockSpec((H1_p, H2_p), lambda i: (0, 0)),        # w2 (resident)
                pl.BlockSpec((1, H2_p), lambda i: (0, 0)),           # b2
                pl.BlockSpec((H2_p, D_out), lambda i: (0, 0)),       # w3 (resident)
                pl.BlockSpec((1, D_out), lambda i: (0, 0)),          # b3
            ],
            out_specs=pl.BlockSpec((batch_tile, D_out), lambda i: (i, 0)),
        ),
        compiler_params=pltpu.CompilerParams(dimension_semantics=dim_sem),
    )(x_p, w1_p, b1_p, w2_p, b2_p, w3_p, b3_p)

    # Only batch padding (if any) to strip; D_out is already exact.
    return out_p[:B]


def init_params(key, input_dim, hidden_dims, output_dim):
    """PyTorch-nn.Linear-style init: U(-1/sqrt(fan_in), 1/sqrt(fan_in)).

    Weights returned already transposed to (in_dim, out_dim)."""
    params = {}
    dims = [input_dim] + list(hidden_dims) + [output_dim]
    names = ["w1", "w2", "w3"]
    bnames = ["b1", "b2", "b3"]
    for idx in range(3):
        fan_in, fan_out = dims[idx], dims[idx + 1]
        key, kw, kb = jax.random.split(key, 3)
        bound = 1.0 / jnp.sqrt(jnp.asarray(fan_in, jnp.float32))
        params[names[idx]] = jax.random.uniform(
            kw, (fan_in, fan_out), jnp.float32, -bound, bound)
        params[bnames[idx]] = jax.random.uniform(
            kb, (fan_out,), jnp.float32, -bound, bound)
    return params


def _reference_forward(x, params, activation="relu", output_activation=None):
    """Pure-JAX reference of the PyTorch forward (eval mode)."""
    def act(v):
        return {"relu": lambda a: jnp.maximum(a, 0.0),
                "tanh": jnp.tanh,
                "gelu": jax.nn.gelu}[activation](v)
    h = act(x @ params["w1"] + params["b1"])
    h = act(h @ params["w2"] + params["b2"])
    o = h @ params["w3"] + params["b3"]
    if output_activation == "sigmoid":
        o = jax.nn.sigmoid(o)
    elif output_activation == "softmax":
        o = jax.nn.softmax(o, axis=-1)
    return o


if __name__ == "__main__":
    # GenericMLPClassifier(input_dim=32, output_dim=1, hidden_dims=[512, 256],
    #                      activation='relu', output_activation='sigmoid')
    INPUT_DIM = 32
    HIDDEN_DIMS = [512, 256]
    OUTPUT_DIM = 1
    BATCH = 16

    key = jax.random.PRNGKey(0)
    key, kx = jax.random.split(key)
    x = jax.random.normal(kx, (BATCH, INPUT_DIM), dtype=jnp.float32)
    key, kp = jax.random.split(key)
    params = init_params(kp, INPUT_DIM, HIDDEN_DIMS, OUTPUT_DIM)

    ref = _reference_forward(x, params, "relu", "sigmoid")

    # f32 MXU-operand path (tight tolerance vs reference).
    out_f32 = mlp_classifier_forward(x, params,
                                     activation="relu",
                                     output_activation="sigmoid",
                                     matmul_dtype=jnp.float32)
    out_f32 = jax.block_until_ready(out_f32)
    assert out_f32.shape == (BATCH, OUTPUT_DIM)
    assert jnp.allclose(out_f32, ref, atol=1e-5, rtol=1e-5), "f32 mismatch vs reference"

    # Default bf16-operand fast path (f32 accumulation).
    out_bf16 = mlp_classifier_forward(x, params,
                                      activation="relu",
                                      output_activation="sigmoid")
    out_bf16 = jax.block_until_ready(out_bf16)
    assert out_bf16.shape == (BATCH, OUTPUT_DIM)
    assert jnp.allclose(out_bf16, ref, atol=5e-2), "bf16 mismatch vs reference"

    # Multi-class / softmax path (unpadded D_out) at tiny shapes.
    key, kx2, kp2 = jax.random.split(key, 3)
    OUT2 = 3
    x2 = jax.random.normal(kx2, (8, INPUT_DIM), dtype=jnp.float32)
    params2 = init_params(kp2, INPUT_DIM, HIDDEN_DIMS, OUT2)
    ref2 = _reference_forward(x2, params2, "relu", "softmax")
    out2 = mlp_classifier_forward(x2, params2,
                                  activation="relu",
                                  output_activation="softmax",
                                  matmul_dtype=jnp.float32)
    out2 = jax.block_until_ready(out2)
    assert out2.shape == (8, OUT2)
    assert jnp.allclose(out2, ref2, atol=1e-5, rtol=1e-5), "softmax mismatch vs reference"

    print("KERNEL_OK")
</pallas_src>

<mosaic_0001>
module attributes {stable_mosaic.version = 11 : i64} {
  func.func @_mlp_kernel(%arg0: i32, %arg1: memref<16x32xf32, #tpu.memory_space<vmem>>, %arg2: memref<32x512xf32, #tpu.memory_space<vmem>>, %arg3: memref<1x512xf32, #tpu.memory_space<vmem>>, %arg4: memref<512x256xf32, #tpu.memory_space<vmem>>, %arg5: memref<1x256xf32, #tpu.memory_space<vmem>>, %arg6: memref<256x1xf32, #tpu.memory_space<vmem>>, %arg7: memref<1x1xf32, #tpu.memory_space<vmem>>, %arg8: memref<16x1xf32, #tpu.memory_space<vmem>>) attributes {dimension_semantics = [#tpu.dimension_semantics<arbitrary>], iteration_bounds = array<i64: 1>, scalar_prefetch = 0 : i64, scratch_operands = 0 : i64, tpu.core_type = #tpu.core_type<tc>, window_params = [{transform_indices = @transform_0, window_bounds = array<i64: 16, 32>}, {pipeline_mode = #tpu.pipeline_mode<synchronous>, transform_indices = @transform_1, window_bounds = array<i64: 32, 512>}, {pipeline_mode = #tpu.pipeline_mode<synchronous>, transform_indices = @transform_2, window_bounds = array<i64: 1, 512>}, {pipeline_mode = #tpu.pipeline_mode<synchronous>, transform_indices = @transform_3, window_bounds = array<i64: 512, 256>}, {pipeline_mode = #tpu.pipeline_mode<synchronous>, transform_indices = @transform_4, window_bounds = array<i64: 1, 256>}, {pipeline_mode = #tpu.pipeline_mode<synchronous>, transform_indices = @transform_5, window_bounds = array<i64: 256, 1>}, {pipeline_mode = #tpu.pipeline_mode<synchronous>, transform_indices = @transform_6, window_bounds = array<i64: 1, 1>}, {transform_indices = @transform_7, window_bounds = array<i64: 16, 1>}]} {
    %c0 = arith.constant 0 : index
    %c0_0 = arith.constant 0 : index
    %0 = vector.load %arg1[%c0, %c0_0] : memref<16x32xf32, #tpu.memory_space<vmem>>, vector<16x32xf32>
    %c0_1 = arith.constant 0 : index
    %c0_2 = arith.constant 0 : index
    %1 = vector.load %arg2[%c0_1, %c0_2] : memref<32x512xf32, #tpu.memory_space<vmem>>, vector<32x512xf32>
    %cst = arith.constant dense<0.000000e+00> : vector<16x512xf32>
    %2 = tpu.matmul %0, %1, %cst {dimension_numbers = #tpu.dot_dimension_numbers<[1], [0], [0], [1], [0, 0, 1, 1], [], []>} : vector<16x32xf32>, vector<32x512xf32>, vector<16x512xf32> -> vector<16x512xf32>
    %c0_3 = arith.constant 0 : index
    %c0_4 = arith.constant 0 : index
    %3 = vector.load %arg3[%c0_3, %c0_4] : memref<1x512xf32, #tpu.memory_space<vmem>>, vector<1x512xf32>
    %4 = vector.broadcast %3 : vector<1x512xf32> to vector<16x512xf32>
    %5 = arith.addf %2, %4 : vector<16x512xf32>
    %cst_5 = arith.constant 0.000000e+00 : f32
    %6 = vector.broadcast %cst_5 : f32 to vector<16x512xf32>
    %7 = arith.maximumf %5, %6 : vector<16x512xf32>
    %c0_6 = arith.constant 0 : index
    %c0_7 = arith.constant 0 : index
    %8 = vector.load %arg4[%c0_6, %c0_7] : memref<512x256xf32, #tpu.memory_space<vmem>>, vector<512x256xf32>
    %cst_8 = arith.constant dense<0.000000e+00> : vector<16x256xf32>
    %9 = tpu.matmul %7, %8, %cst_8 {dimension_numbers = #tpu.dot_dimension_numbers<[1], [0], [0], [1], [0, 0, 1, 1], [], []>} : vector<16x512xf32>, vector<512x256xf32>, vector<16x256xf32> -> vector<16x256xf32>
    %c0_9 = arith.constant 0 : index
    %c0_10 = arith.constant 0 : index
    %10 = vector.load %arg5[%c0_9, %c0_10] : memref<1x256xf32, #tpu.memory_space<vmem>>, vector<1x256xf32>
    %11 = vector.broadcast %10 : vector<1x256xf32> to vector<16x256xf32>
    %12 = arith.addf %9, %11 : vector<16x256xf32>
    %cst_11 = arith.constant 0.000000e+00 : f32
    %13 = vector.broadcast %cst_11 : f32 to vector<16x256xf32>
    %14 = arith.maximumf %12, %13 : vector<16x256xf32>
    %c0_12 = arith.constant 0 : index
    %c0_13 = arith.constant 0 : index
    %15 = vector.load %arg6[%c0_12, %c0_13] : memref<256x1xf32, #tpu.memory_space<vmem>>, vector<256x1xf32>
    %cst_14 = arith.constant dense<0.000000e+00> : vector<16x1xf32>
    %16 = tpu.matmul %14, %15, %cst_14 {dimension_numbers = #tpu.dot_dimension_numbers<[1], [0], [0], [1], [0, 0, 1, 1], [], []>} : vector<16x256xf32>, vector<256x1xf32>, vector<16x1xf32> -> vector<16x1xf32>
    %c0_15 = arith.constant 0 : index
    %c0_16 = arith.constant 0 : index
    %17 = vector.load %arg7[%c0_15, %c0_16] : memref<1x1xf32, #tpu.memory_space<vmem>>, vector<1x1xf32>
    %18 = vector.broadcast %17 : vector<1x1xf32> to vector<16x1xf32>
    %19 = arith.addf %16, %18 : vector<16x1xf32>
    %20 = arith.negf %19 : vector<16x1xf32>
    %21 = math.exp %20 : vector<16x1xf32>
    %cst_17 = arith.constant 1.000000e+00 : f32
    %22 = vector.broadcast %cst_17 : f32 to vector<16x1xf32>
    %23 = arith.addf %22, %21 : vector<16x1xf32>
    %24 = arith.divf %22, %23 : vector<16x1xf32>
    %c0_18 = arith.constant 0 : index
    %c0_19 = arith.constant 0 : index
    %25 = vector.load %arg8[%c0_18, %c0_19] : memref<16x1xf32, #tpu.memory_space<vmem>>, vector<16x1xf32>
    tpu.vector_store %arg8[%c0_18, %c0_19], %24 {strides = array<i32>} : memref<16x1xf32, #tpu.memory_space<vmem>>, vector<16x1xf32>,
    return
  }
  func.func @transform_0(%arg0: i32) -> (i32, i32) {
    %c0_i32 = arith.constant 0 : i32
    %c0_i32_0 = arith.constant 0 : i32
    return %arg0, %c0_i32 : i32, i32
  }
  func.func @transform_1(%arg0: i32) -> (i32, i32) {
    %c0_i32 = arith.constant 0 : i32
    %c0_i32_0 = arith.constant 0 : i32
    %c0_i32_1 = arith.constant 0 : i32
    return %c0_i32, %c0_i32_0 : i32, i32
  }
  func.func @transform_2(%arg0: i32) -> (i32, i32) {
    %c0_i32 = arith.constant 0 : i32
    %c0_i32_0 = arith.constant 0 : i32
    %c0_i32_1 = arith.constant 0 : i32
    return %c0_i32, %c0_i32_0 : i32, i32
  }
  func.func @transform_3(%arg0: i32) -> (i32, i32) {
    %c0_i32 = arith.constant 0 : i32
    %c0_i32_0 = arith.constant 0 : i32
    %c0_i32_1 = arith.constant 0 : i32
    return %c0_i32, %c0_i32_0 : i32, i32
  }
  func.func @transform_4(%arg0: i32) -> (i32, i32) {
    %c0_i32 = arith.constant 0 : i32
    %c0_i32_0 = arith.constant 0 : i32
    %c0_i32_1 = arith.constant 0 : i32
    return %c0_i32, %c0_i32_0 : i32, i32
  }
  func.func @transform_5(%arg0: i32) -> (i32, i32) {
    %c0_i32 = arith.constant 0 : i32
    %c0_i32_0 = arith.constant 0 : i32
    %c0_i32_1 = arith.constant 0 : i32
    return %c0_i32, %c0_i32_0 : i32, i32
  }
  func.func @transform_6(%arg0: i32) -> (i32, i32) {
    %c0_i32 = arith.constant 0 : i32
    %c0_i32_0 = arith.constant 0 : i32
    %c0_i32_1 = arith.constant 0 : i32
    return %c0_i32, %c0_i32_0 : i32, i32
  }
  func.func @transform_7(%arg0: i32) -> (i32, i32) {
    %c0_i32 = arith.constant 0 : i32
    %c0_i32_0 = arith.constant 0 : i32
    return %arg0, %c0_i32 : i32, i32
  }
}

</mosaic_0001>

<llo_original>
// kernel: tpu_custom_call.1
$region0: #{tpu_custom_call.1}
  #allocation0 [shape = 'u32[]', space=smem, size = 0x4, offset = 0x4, fixed_abs, tag = 'smem constant byte address 0x4 - core index']
  #allocation1 [shape = 'u32[72,128]{1,0:T(1,128)}', space=vmem, size = 0x9000, scoped, tag = 'internal scratch']
  #allocation2 [shape = 'f32[1,1]{1,0:T(1,128)S(1)}', space=vmem, size = 0x200, scoped, tag = 'scoped memory for tpu_custom_call.1']
  %s0 = inlined_call_operand.vmem [shape: f32[16,32], index: 0, kind: input, shape index: {}]
  %s1 = inlined_call_operand.vmem [shape: f32[32,512], index: 1, kind: input, shape index: {}]
  %s2 = inlined_call_operand.vmem [shape: f32[1,512], index: 2, kind: input, shape index: {}]
  %s3 = inlined_call_operand.hbm [shape: f32[512,256], index: 3, kind: input, shape index: {}]
  %s4 = inlined_call_operand.vmem [shape: f32[1,256], index: 4, kind: input, shape index: {}]
  %s5 = inlined_call_operand.vmem [shape: f32[256,1], index: 5, kind: input, shape index: {}]
  %s6 = inlined_call_operand.<no memory space> [shape: f32[1,1], index: 6, kind: input, shape index: {}]
  %s7 = inlined_call_operand.vmem [shape: f32[16,1], index: 7, kind: output, shape index: {}]
  %s8 = sld [smem:[#allocation0]]
  $region42: #{tpu_custom_call.1} parent=0
    _
  %s10 = ssub.s32 1, %s8
  %s11 = scalar_select 0, %s10, %s8
  %v12 = vstv %s6
  %13 = vst [vmem:[#allocation2] sm:$0x1] %v12
  $region1: #{tpu_custom_call.1} parent=0
    #allocation3 [shape = 'u8[524288]{0}', space=vmem, size = 0x80000, scoped, tag = 'input window, operand 3, single buffered']
    #allocation4 [shape = 's32[1]{0}', space=sflag, size = 0x4, scoped, tag = 'scoped memory for tpu_custom_call.1']
    %14 = vsyncpa [#allocation4], 0
    // Predicated region
    $region2: #{tpu_custom_call.1} parent=1 // pred_check
      _
    $region3: #{tpu_custom_call.1} parent=1 // pred_check_branch
      %16 = sbr.rel (0) target = $region5
    $region4: #{tpu_custom_call.1} parent=1 // pred_region
      _
    $region5: #{tpu_custom_call.1} parent=1 // pred_fallthru
      _
    // Predicated region
    $region6: #{tpu_custom_call.1} parent=1 // pred_check
      _
    $region7: #{tpu_custom_call.1} parent=1 // pred_check_branch
      %18 = sbr.rel (0) target = $region9
    $region8: #{tpu_custom_call.1} parent=1 // pred_region
      _
    $region9: #{tpu_custom_call.1} parent=1 // pred_fallthru
      _
    // Predicated region
    $region10: #{tpu_custom_call.1} parent=1 // pred_check
      _
    $region11: #{tpu_custom_call.1} parent=1 // pred_check_branch
      %20 = sbr.rel (0) target = $region13
    $region12: #{tpu_custom_call.1} parent=1 // pred_region
      _
    $region13: #{tpu_custom_call.1} parent=1 // pred_fallthru
      _
    // Predicated region
    $region14: #{tpu_custom_call.1} parent=1 // pred_check
      _
    $region15: #{tpu_custom_call.1} parent=1 // pred_check_branch
      %22 = sbr.rel (0) target = $region17
    $region16: #{tpu_custom_call.1} parent=1 // pred_region
      %24 = vsyncadd [#allocation4], 0
      %s25 = sshll.u32 %s3, 4
      %s26 = int_to_ptr.hbm [resolvable:$true] %s25
      %s27 = sshll.u32 [#allocation3], 4
      %s28 = int_to_ptr.vmem [resolvable:$true] %s27
      %33 = dma.hbm_to_vmem [thread:$0]  %s26, 16384, %s28, [#allocation4], 256, 256, 16
    $region17: #{tpu_custom_call.1} parent=1 // pred_fallthru
      _
    // Predicated region
    $region18: #{tpu_custom_call.1} parent=1 // pred_check
      _
    $region19: #{tpu_custom_call.1} parent=1 // pred_check_branch
      %35 = sbr.rel (0) target = $region21
    $region20: #{tpu_custom_call.1} parent=1 // pred_region
      _
    $region21: #{tpu_custom_call.1} parent=1 // pred_fallthru
      _
    // Predicated region
    $region22: #{tpu_custom_call.1} parent=1 // pred_check
      _
    $region23: #{tpu_custom_call.1} parent=1 // pred_check_branch
      %37 = sbr.rel (0) target = $region25
    $region24: #{tpu_custom_call.1} parent=1 // pred_region
      _
    $region25: #{tpu_custom_call.1} parent=1 // pred_fallthru
      _
    // Predicated region
    $region26: #{tpu_custom_call.1} parent=1 // pred_check
      _
    $region27: #{tpu_custom_call.1} parent=1 // pred_check_branch
      %39 = sbr.rel (0) target = $region29
    $region28: #{tpu_custom_call.1} parent=1 // pred_region
      _
    $region29: #{tpu_custom_call.1} parent=1 // pred_fallthru
      _
    // Predicated region
    $region30: #{tpu_custom_call.1} parent=1 // pred_check
      _
    $region31: #{tpu_custom_call.1} parent=1 // pred_check_branch
      %41 = sbr.rel (0) target = $region33
    $region32: #{tpu_custom_call.1} parent=1 // pred_region
      %43 = dma.done [#allocation4], 16384
    $region33: #{tpu_custom_call.1} parent=1 // pred_fallthru
      _
    %v44 = vld [vmem:[%s0] sm:$0xff]
    %v45 = vld [vmem:[%s0 + $0x8] sm:$0xff]
    %v46 = vld [vmem:[%s1] sm:$0xff]
    %v47 = vld [vmem:[%s1 + $0x8] sm:$0xff]
    %v48 = vld [vmem:[%s1 + $0x10] sm:$0xff]
    %v49 = vld [vmem:[%s1 + $0x18] sm:$0xff]
    %v50 = vld [vmem:[%s1 + $0x20] sm:$0xff]
    %v51 = vld [vmem:[%s1 + $0x28] sm:$0xff]
    %v52 = vld [vmem:[%s1 + $0x30] sm:$0xff]
    %v53 = vld [vmem:[%s1 + $0x38] sm:$0xff]
    %v54 = vld [vmem:[%s1 + $0x40] sm:$0xff]
    %v55 = vld [vmem:[%s1 + $0x48] sm:$0xff]
    %v56 = vld [vmem:[%s1 + $0x50] sm:$0xff]
    %v57 = vld [vmem:[%s1 + $0x58] sm:$0xff]
    %v58 = vld [vmem:[%s1 + $0x60] sm:$0xff]
    %v59 = vld [vmem:[%s1 + $0x68] sm:$0xff]
    %v60 = vld [vmem:[%s1 + $0x70] sm:$0xff]
    %v61 = vld [vmem:[%s1 + $0x78] sm:$0xff]
    %v62 = vld [vmem:[%s2] sm:$0xf]
    %v64 = vperm.slane %v62, 0
    %v65 = vperm.slane %v62, 1
    %v66 = vperm.slane %v62, 2
    %v67 = vperm.slane %v62, 3
    %vm72 = vcmask 261120
    %v74 = vsel %vm72, %v44, 0
    %v77 = vsel %vm72, %v45, 0
    %79 = vmatpush.msra.mxu0 0.0
    %80 = vmatpush.msra.mxu0 0.0
    %81 = vmatpush.msra.mxu0 0.0
    %82 = vmatpush.msra.mxu0 0.0
    %83 = vmatpush.msra.mxu0 0.0
    %84 = vmatpush.msra.mxu0 0.0
    %85 = vmatpush.msra.mxu0 0.0
    %86 = vmatpush.msra.mxu0 0.0
    %87 = vmatpush.msra.mxu0 0.0
    %88 = vmatpush.msra.mxu0 0.0
    %89 = vmatpush.msra.mxu0 0.0
    %90 = vmatpush.msra.mxu0 0.0
    %91 = vmatpush.msra.mxu0 %v58
    %92 = vmatpush.msra.mxu0 %v54
    %93 = vmatpush.msra.mxu0 %v50
    %94 = vmatpush.msra.mxu0 %v46
    %95 = vmatmul.f32.gmra.mxu0 %v74
    %v96 = vpop.f32.mrf.mxu0
    %v97 = vadd.f32 %v64, %v96
    %98 = vmatmul.f32.gmra.mxu0 %v77
    %v99 = vpop.f32.mrf.mxu0
    %v100 = vadd.f32 %v64, %v99
    %101 = vdwg.mxu0
    %102 = vmatpush.msra.mxu0 0.0
    %103 = vmatpush.msra.mxu0 0.0
    %104 = vmatpush.msra.mxu0 0.0
    %105 = vmatpush.msra.mxu0 0.0
    %106 = vmatpush.msra.mxu0 0.0
    %107 = vmatpush.msra.mxu0 0.0
    %108 = vmatpush.msra.mxu0 0.0
    %109 = vmatpush.msra.mxu0 0.0
    %110 = vmatpush.msra.mxu0 0.0
    %111 = vmatpush.msra.mxu0 0.0
    %112 = vmatpush.msra.mxu0 0.0
    %113 = vmatpush.msra.mxu0 0.0
    %114 = vmatpush.msra.mxu0 %v59
    %115 = vmatpush.msra.mxu0 %v55
    %116 = vmatpush.msra.mxu0 %v51
    %117 = vmatpush.msra.mxu0 %v47
    %118 = vmatmul.f32.gmra.mxu0 %v74
    %v119 = vpop.f32.mrf.mxu0
    %v120 = vadd.f32 %v65, %v119
    %121 = vmatmul.f32.gmra.mxu0 %v77
    %v122 = vpop.f32.mrf.mxu0
    %v123 = vadd.f32 %v65, %v122
    %124 = vdwg.mxu0
    %125 = vmatpush.msra.mxu0 0.0
    %126 = vmatpush.msra.mxu0 0.0
    %127 = vmatpush.msra.mxu0 0.0
    %128 = vmatpush.msra.mxu0 0.0
    %129 = vmatpush.msra.mxu0 0.0
    %130 = vmatpush.msra.mxu0 0.0
    %131 = vmatpush.msra.mxu0 0.0
    %132 = vmatpush.msra.mxu0 0.0
    %133 = vmatpush.msra.mxu0 0.0
    %134 = vmatpush.msra.mxu0 0.0
    %135 = vmatpush.msra.mxu0 0.0
    %136 = vmatpush.msra.mxu0 0.0
    %137 = vmatpush.msra.mxu0 %v60
    %138 = vmatpush.msra.mxu0 %v56
    %139 = vmatpush.msra.mxu0 %v52
    %140 = vmatpush.msra.mxu0 %v48
    %141 = vmatmul.f32.gmra.mxu0 %v74
    %v142 = vpop.f32.mrf.mxu0
    %v143 = vadd.f32 %v66, %v142
    %144 = vmatmul.f32.gmra.mxu0 %v77
    %v145 = vpop.f32.mrf.mxu0
    %v146 = vadd.f32 %v66, %v145
    %147 = vdwg.mxu0
    %148 = vmatpush.msra.mxu0 0.0
    %149 = vmatpush.msra.mxu0 0.0
    %150 = vmatpush.msra.mxu0 0.0
    %151 = vmatpush.msra.mxu0 0.0
    %152 = vmatpush.msra.mxu0 0.0
    %153 = vmatpush.msra.mxu0 0.0
    %154 = vmatpush.msra.mxu0 0.0
    %155 = vmatpush.msra.mxu0 0.0
    %156 = vmatpush.msra.mxu0 0.0
    %157 = vmatpush.msra.mxu0 0.0
    %158 = vmatpush.msra.mxu0 0.0
    %159 = vmatpush.msra.mxu0 0.0
    %160 = vmatpush.msra.mxu0 %v61
    %161 = vmatpush.msra.mxu0 %v57
    %162 = vmatpush.msra.mxu0 %v53
    %163 = vmatpush.msra.mxu0 %v49
    %164 = vmatmul.f32.gmra.mxu0 %v74
    %v165 = vpop.f32.mrf.mxu0
    %v166 = vadd.f32 %v67, %v165
    %167 = vmatmul.f32.gmra.mxu0 %v77
    %v168 = vpop.f32.mrf.mxu0
    %v169 = vadd.f32 %v67, %v168
    %170 = vdwg.mxu0
    %v171 = vmax.f32 %v97, 0.0
    %v172 = vmax.f32 %v120, 0.0
    %v173 = vmax.f32 %v143, 0.0
    %v174 = vmax.f32 %v166, 0.0
    %v175 = vmax.f32 %v100, 0.0
    %v176 = vmax.f32 %v123, 0.0
    %v177 = vmax.f32 %v146, 0.0
    %v178 = vmax.f32 %v169, 0.0
    %v179 = vld [vmem:[#allocation3] sm:$0xff]
    %v180 = vld [vmem:[#allocation3 + $0x8] sm:$0xff]
    %v181 = vld [vmem:[#allocation3 + $0x10] sm:$0xff]
    %v182 = vld [vmem:[#allocation3 + $0x18] sm:$0xff]
    %v183 = vld [vmem:[#allocation3 + $0x20] sm:$0xff]
    %v184 = vld [vmem:[#allocation3 + $0x28] sm:$0xff]
    %v185 = vld [vmem:[#allocation3 + $0x30] sm:$0xff]
    %v186 = vld [vmem:[#allocation3 + $0x38] sm:$0xff]
    %v187 = vld [vmem:[#allocation3 + $0x40] sm:$0xff]
    %v188 = vld [vmem:[#allocation3 + $0x48] sm:$0xff]
    %v189 = vld [vmem:[#allocation3 + $0x50] sm:$0xff]
    %v190 = vld [vmem:[#allocation3 + $0x58] sm:$0xff]
    %v191 = vld [vmem:[#allocation3 + $0x60] sm:$0xff]
    %v192 = vld [vmem:[#allocation3 + $0x68] sm:$0xff]
    %v193 = vld [vmem:[#allocation3 + $0x70] sm:$0xff]
    %v194 = vld [vmem:[#allocation3 + $0x78] sm:$0xff]
    %v195 = vld [vmem:[#allocation3 + $0x80] sm:$0xff]
    %v196 = vld [vmem:[#allocation3 + $0x88] sm:$0xff]
    %v197 = vld [vmem:[#allocation3 + $0x90] sm:$0xff]
    %v198 = vld [vmem:[#allocation3 + $0x98] sm:$0xff]
    %v199 = vld [vmem:[#allocation3 + $0xa0] sm:$0xff]
    %v200 = vld [vmem:[#allocation3 + $0xa8] sm:$0xff]
    %v201 = vld [vmem:[#allocation3 + $0xb0] sm:$0xff]
    %v202 = vld [vmem:[#allocation3 + $0xb8] sm:$0xff]
    %v203 = vld [vmem:[#allocation3 + $0xc0] sm:$0xff]
    %v204 = vld [vmem:[#allocation3 + $0xc8] sm:$0xff]
    %v205 = vld [vmem:[#allocation3 + $0xd0] sm:$0xff]
    %v206 = vld [vmem:[#allocation3 + $0xd8] sm:$0xff]
    %v207 = vld [vmem:[#allocation3 + $0xe0] sm:$0xff]
    %v208 = vld [vmem:[#allocation3 + $0xe8] sm:$0xff]
    %v209 = vld [vmem:[#allocation3 + $0xf0] sm:$0xff]
    %v210 = vld [vmem:[#allocation3 + $0xf8] sm:$0xff]
    %v211 = vld [vmem:[#allocation3 + $0x100] sm:$0xff]
    %v212 = vld [vmem:[#allocation3 + $0x108] sm:$0xff]
    %v213 = vld [vmem:[#allocation3 + $0x110] sm:$0xff]
    %v214 = vld [vmem:[#allocation3 + $0x118] sm:$0xff]
    %v215 = vld [vmem:[#allocation3 + $0x120] sm:$0xff]
    %v216 = vld [vmem:[#allocation3 + $0x128] sm:$0xff]
    %v217 = vld [vmem:[#allocation3 + $0x130] sm:$0xff]
    %v218 = vld [vmem:[#allocation3 + $0x138] sm:$0xff]
    %v219 = vld [vmem:[#allocation3 + $0x140] sm:$0xff]
    %v220 = vld [vmem:[#allocation3 + $0x148] sm:$0xff]
    %v221 = vld [vmem:[#allocation3 + $0x150] sm:$0xff]
    %v222 = vld [vmem:[#allocation3 + $0x158] sm:$0xff]
    %v223 = vld [vmem:[#allocation3 + $0x160] sm:$0xff]
    %v224 = vld [vmem:[#allocation3 + $0x168] sm:$0xff]
    %v225 = vld [vmem:[#allocation3 + $0x170] sm:$0xff]
    %v226 = vld [vmem:[#allocation3 + $0x178] sm:$0xff]
    %v227 = vld [vmem:[#allocation3 + $0x180] sm:$0xff]
    %v228 = vld [vmem:[#allocation3 + $0x188] sm:$0xff]
    %v229 = vld [vmem:[#allocation3 + $0x190] sm:$0xff]
    %v230 = vld [vmem:[#allocation3 + $0x198] sm:$0xff]
    %v231 = vld [vmem:[#allocation3 + $0x1a0] sm:$0xff]
    %v232 = vld [vmem:[#allocation3 + $0x1a8] sm:$0xff]
    %v233 = vld [vmem:[#allocation3 + $0x1b0] sm:$0xff]
    %v234 = vld [vmem:[#allocation3 + $0x1b8] sm:$0xff]
    %v235 = vld [vmem:[#allocation3 + $0x1c0] sm:$0xff]
    %v236 = vld [vmem:[#allocation3 + $0x1c8] sm:$0xff]
    %v237 = vld [vmem:[#allocation3 + $0x1d0] sm:$0xff]
    %v238 = vld [vmem:[#allocation3 + $0x1d8] sm:$0xff]
    %v239 = vld [vmem:[#allocation3 + $0x1e0] sm:$0xff]
    %v240 = vld [vmem:[#allocation3 + $0x1e8] sm:$0xff]
    %v241 = vld [vmem:[#allocation3 + $0x1f0] sm:$0xff]
    %v242 = vld [vmem:[#allocation3 + $0x1f8] sm:$0xff]
    %v243 = vld [vmem:[#allocation3 + $0x200] sm:$0xff]
    %v244 = vld [vmem:[#allocation3 + $0x208] sm:$0xff]
    %v245 = vld [vmem:[#allocation3 + $0x210] sm:$0xff]
    %v246 = vld [vmem:[#allocation3 + $0x218] sm:$0xff]
    %v247 = vld [vmem:[#allocation3 + $0x220] sm:$0xff]
    %v248 = vld [vmem:[#allocation3 + $0x228] sm:$0xff]
    %v249 = vld [vmem:[#allocation3 + $0x230] sm:$0xff]
    %v250 = vld [vmem:[#allocation3 + $0x238] sm:$0xff]
    %v251 = vld [vmem:[#allocation3 + $0x240] sm:$0xff]
    %v252 = vld [vmem:[#allocation3 + $0x248] sm:$0xff]
    %v253 = vld [vmem:[#allocation3 + $0x250] sm:$0xff]
    %v254 = vld [vmem:[#allocation3 + $0x258] sm:$0xff]
    %v255 = vld [vmem:[#allocation3 + $0x260] sm:$0xff]
    %v256 = vld [vmem:[#allocation3 + $0x268] sm:$0xff]
    %v257 = vld [vmem:[#allocation3 + $0x270] sm:$0xff]
    %v258 = vld [vmem:[#allocation3 + $0x278] sm:$0xff]
    %v259 = vld [vmem:[#allocation3 + $0x280] sm:$0xff]
    %v260 = vld [vmem:[#allocation3 + $0x288] sm:$0xff]
    %v261 = vld [vmem:[#allocation3 + $0x290] sm:$0xff]
    %v262 = vld [vmem:[#allocation3 + $0x298] sm:$0xff]
    %v263 = vld [vmem:[#allocation3 + $0x2a0] sm:$0xff]
    %v264 = vld [vmem:[#allocation3 + $0x2a8] sm:$0xff]
    %v265 = vld [vmem:[#allocation3 + $0x2b0] sm:$0xff]
    %v266 = vld [vmem:[#allocation3 + $0x2b8] sm:$0xff]
    %v267 = vld [vmem:[#allocation3 + $0x2c0] sm:$0xff]
    %v268 = vld [vmem:[#allocation3 + $0x2c8] sm:$0xff]
    %v269 = vld [vmem:[#allocation3 + $0x2d0] sm:$0xff]
    %v270 = vld [vmem:[#allocation3 + $0x2d8] sm:$0xff]
    %v271 = vld [vmem:[#allocation3 + $0x2e0] sm:$0xff]
    %v272 = vld [vmem:[#allocation3 + $0x2e8] sm:$0xff]
    %v273 = vld [vmem:[#allocation3 + $0x2f0] sm:$0xff]
    %v274 = vld [vmem:[#allocation3 + $0x2f8] sm:$0xff]
    %v275 = vld [vmem:[#allocation3 + $0x300] sm:$0xff]
    %v276 = vld [vmem:[#allocation3 + $0x308] sm:$0xff]
    %v277 = vld [vmem:[#allocation3 + $0x310] sm:$0xff]
    %v278 = vld [vmem:[#allocation3 + $0x318] sm:$0xff]
    %v279 = vld [vmem:[#allocation3 + $0x320] sm:$0xff]
    %v280 = vld [vmem:[#allocation3 + $0x328] sm:$0xff]
    %v281 = vld [vmem:[#allocation3 + $0x330] sm:$0xff]
    %v282 = vld [vmem:[#allocation3 + $0x338] sm:$0xff]
    %v283 = vld [vmem:[#allocation3 + $0x340] sm:$0xff]
    %v284 = vld [vmem:[#allocation3 + $0x348] sm:$0xff]
    %v285 = vld [vmem:[#allocation3 + $0x350] sm:$0xff]
    %v286 = vld [vmem:[#allocation3 + $0x358] sm:$0xff]
    %v287 = vld [vmem:[#allocation3 + $0x360] sm:$0xff]
    %v288 = vld [vmem:[#allocation3 + $0x368] sm:$0xff]
    %v289 = vld [vmem:[#allocation3 + $0x370] sm:$0xff]
    %v290 = vld [vmem:[#allocation3 + $0x378] sm:$0xff]
    %v291 = vld [vmem:[#allocation3 + $0x380] sm:$0xff]
    %v292 = vld [vmem:[#allocation3 + $0x388] sm:$0xff]
    %v293 = vld [vmem:[#allocation3 + $0x390] sm:$0xff]
    %v294 = vld [vmem:[#allocation3 + $0x398] sm:$0xff]
    %v295 = vld [vmem:[#allocation3 + $0x3a0] sm:$0xff]
    %v296 = vld [vmem:[#allocation3 + $0x3a8] sm:$0xff]
    %v297 = vld [vmem:[#allocation3 + $0x3b0] sm:$0xff]
    %v298 = vld [vmem:[#allocation3 + $0x3b8] sm:$0xff]
    %v299 = vld [vmem:[#allocation3 + $0x3c0] sm:$0xff]
    %v300 = vld [vmem:[#allocation3 + $0x3c8] sm:$0xff]
    %v301 = vld [vmem:[#allocation3 + $0x3d0] sm:$0xff]
    %v302 = vld [vmem:[#allocation3 + $0x3d8] sm:$0xff]
    %v303 = vld [vmem:[#allocation3 + $0x3e0] sm:$0xff]
    %v304 = vld [vmem:[#allocation3 + $0x3e8] sm:$0xff]
    %v305 = vld [vmem:[#allocation3 + $0x3f0] sm:$0xff]
    %v306 = vld [vmem:[#allocation3 + $0x3f8] sm:$0xff]
    %v307 = vld [vmem:[%s4] sm:$0x3]
    %v309 = vperm.slane %v307, 0
    %v310 = vperm.slane %v307, 1
    %313 = vmatpush.msra.mxu0 %v209
    %314 = vmatpush.msra.mxu0 %v207
    %315 = vmatpush.msra.mxu0 %v205
    %316 = vmatpush.msra.mxu0 %v203
    %317 = vmatpush.msra.mxu0 %v201
    %318 = vmatpush.msra.mxu0 %v199
    %319 = vmatpush.msra.mxu0 %v197
    %320 = vmatpush.msra.mxu0 %v195
    %321 = vmatpush.msra.mxu0 %v193
    %322 = vmatpush.msra.mxu0 %v191
    %323 = vmatpush.msra.mxu0 %v189
    %324 = vmatpush.msra.mxu0 %v187
    %325 = vmatpush.msra.mxu0 %v185
    %326 = vmatpush.msra.mxu0 %v183
    %327 = vmatpush.msra.mxu0 %v181
    %328 = vmatpush.msra.mxu0 %v179
    %329 = vmatmul.f32.gmra.mxu0 %v171
    %v330 = vpop.f32.mrf.mxu0
    %v331 = vadd.f32 %v309, %v330
    %332 = vmatmul.f32.gmra.mxu0 %v175
    %v333 = vpop.f32.mrf.mxu0
    %v334 = vadd.f32 %v309, %v333
    %335 = vdwg.mxu0
    %336 = vmatpush.msra.mxu0 %v241
    %337 = vmatpush.msra.mxu0 %v239
    %338 = vmatpush.msra.mxu0 %v237
    %339 = vmatpush.msra.mxu0 %v235
    %340 = vmatpush.msra.mxu0 %v233
    %341 = vmatpush.msra.mxu0 %v231
    %342 = vmatpush.msra.mxu0 %v229
    %343 = vmatpush.msra.mxu0 %v227
    %344 = vmatpush.msra.mxu0 %v225
    %345 = vmatpush.msra.mxu0 %v223
    %346 = vmatpush.msra.mxu0 %v221
    %347 = vmatpush.msra.mxu0 %v219
    %348 = vmatpush.msra.mxu0 %v217
    %349 = vmatpush.msra.mxu0 %v215
    %350 = vmatpush.msra.mxu0 %v213
    %351 = vmatpush.msra.mxu0 %v211
    %352 = vmatmul.f32.gmra.mxu0 %v172
    %v353 = vpop.f32.mrf.mxu0
    %v354 = vadd.f32 %v331, %v353
    %355 = vmatmul.f32.gmra.mxu0 %v176
    %v356 = vpop.f32.mrf.mxu0
    %v357 = vadd.f32 %v334, %v356
    %358 = vdwg.mxu0
    %359 = vmatpush.msra.mxu0 %v273
    %360 = vmatpush.msra.mxu0 %v271
    %361 = vmatpush.msra.mxu0 %v269
    %362 = vmatpush.msra.mxu0 %v267
    %363 = vmatpush.msra.mxu0 %v265
    %364 = vmatpush.msra.mxu0 %v263
    %365 = vmatpush.msra.mxu0 %v261
    %366 = vmatpush.msra.mxu0 %v259
    %367 = vmatpush.msra.mxu0 %v257
    %368 = vmatpush.msra.mxu0 %v255
    %369 = vmatpush.msra.mxu0 %v253
    %370 = vmatpush.msra.mxu0 %v251
    %371 = vmatpush.msra.mxu0 %v249
    %372 = vmatpush.msra.mxu0 %v247
    %373 = vmatpush.msra.mxu0 %v245
    %374 = vmatpush.msra.mxu0 %v243
    %375 = vmatmul.f32.gmra.mxu0 %v173
    %v376 = vpop.f32.mrf.mxu0
    %v377 = vadd.f32 %v354, %v376
    %378 = vmatmul.f32.gmra.mxu0 %v177
    %v379 = vpop.f32.mrf.mxu0
    %v380 = vadd.f32 %v357, %v379
    %381 = vdwg.mxu0
    %382 = vmatpush.msra.mxu0 %v305
    %383 = vmatpush.msra.mxu0 %v303
    %384 = vmatpush.msra.mxu0 %v301
    %385 = vmatpush.msra.mxu0 %v299
    %386 = vmatpush.msra.mxu0 %v297
    %387 = vmatpush.msra.mxu0 %v295
    %388 = vmatpush.msra.mxu0 %v293
    %389 = vmatpush.msra.mxu0 %v291
    %390 = vmatpush.msra.mxu0 %v289
    %391 = vmatpush.msra.mxu0 %v287
    %392 = vmatpush.msra.mxu0 %v285
    %393 = vmatpush.msra.mxu0 %v283
    %394 = vmatpush.msra.mxu0 %v281
    %395 = vmatpush.msra.mxu0 %v279
    %396 = vmatpush.msra.mxu0 %v277
    %397 = vmatpush.msra.mxu0 %v275
    %398 = vmatmul.f32.gmra.mxu0 %v174
    %v399 = vpop.f32.mrf.mxu0
    %v400 = vadd.f32 %v377, %v399
    %401 = vmatmul.f32.gmra.mxu0 %v178
    %v402 = vpop.f32.mrf.mxu0
    %v403 = vadd.f32 %v380, %v402
    %404 = vdwg.mxu0
    %405 = vmatpush.msra.mxu0 %v210
    %406 = vmatpush.msra.mxu0 %v208
    %407 = vmatpush.msra.mxu0 %v206
    %408 = vmatpush.msra.mxu0 %v204
    %409 = vmatpush.msra.mxu0 %v202
    %410 = vmatpush.msra.mxu0 %v200
    %411 = vmatpush.msra.mxu0 %v198
    %412 = vmatpush.msra.mxu0 %v196
    %413 = vmatpush.msra.mxu0 %v194
    %414 = vmatpush.msra.mxu0 %v192
    %415 = vmatpush.msra.mxu0 %v190
    %416 = vmatpush.msra.mxu0 %v188
    %417 = vmatpush.msra.mxu0 %v186
    %418 = vmatpush.msra.mxu0 %v184
    %419 = vmatpush.msra.mxu0 %v182
    %420 = vmatpush.msra.mxu0 %v180
    %421 = vmatmul.f32.gmra.mxu0 %v171
    %v422 = vpop.f32.mrf.mxu0
    %v423 = vadd.f32 %v310, %v422
    %424 = vmatmul.f32.gmra.mxu0 %v175
    %v425 = vpop.f32.mrf.mxu0
    %v426 = vadd.f32 %v310, %v425
    %427 = vdwg.mxu0
    %428 = vmatpush.msra.mxu0 %v242
    %429 = vmatpush.msra.mxu0 %v240
    %430 = vmatpush.msra.mxu0 %v238
    %431 = vmatpush.msra.mxu0 %v236
    %432 = vmatpush.msra.mxu0 %v234
    %433 = vmatpush.msra.mxu0 %v232
    %434 = vmatpush.msra.mxu0 %v230
    %435 = vmatpush.msra.mxu0 %v228
    %436 = vmatpush.msra.mxu0 %v226
    %437 = vmatpush.msra.mxu0 %v224
    %438 = vmatpush.msra.mxu0 %v222
    %439 = vmatpush.msra.mxu0 %v220
    %440 = vmatpush.msra.mxu0 %v218
    %441 = vmatpush.msra.mxu0 %v216
    %442 = vmatpush.msra.mxu0 %v214
    %443 = vmatpush.msra.mxu0 %v212
    %444 = vmatmul.f32.gmra.mxu0 %v172
    %v445 = vpop.f32.mrf.mxu0
    %v446 = vadd.f32 %v423, %v445
    %447 = vmatmul.f32.gmra.mxu0 %v176
    %v448 = vpop.f32.mrf.mxu0
    %v449 = vadd.f32 %v426, %v448
    %450 = vdwg.mxu0
    %451 = vmatpush.msra.mxu0 %v274
    %452 = vmatpush.msra.mxu0 %v272
    %453 = vmatpush.msra.mxu0 %v270
    %454 = vmatpush.msra.mxu0 %v268
    %455 = vmatpush.msra.mxu0 %v266
    %456 = vmatpush.msra.mxu0 %v264
    %457 = vmatpush.msra.mxu0 %v262
    %458 = vmatpush.msra.mxu0 %v260
    %459 = vmatpush.msra.mxu0 %v258
    %460 = vmatpush.msra.mxu0 %v256
    %461 = vmatpush.msra.mxu0 %v254
    %462 = vmatpush.msra.mxu0 %v252
    %463 = vmatpush.msra.mxu0 %v250
    %464 = vmatpush.msra.mxu0 %v248
    %465 = vmatpush.msra.mxu0 %v246
    %466 = vmatpush.msra.mxu0 %v244
    %467 = vmatmul.f32.gmra.mxu0 %v173
    %v468 = vpop.f32.mrf.mxu0
    %v469 = vadd.f32 %v446, %v468
    %470 = vmatmul.f32.gmra.mxu0 %v177
    %v471 = vpop.f32.mrf.mxu0
    %v472 = vadd.f32 %v449, %v471
    %473 = vdwg.mxu0
    %474 = vmatpush.msra.mxu0 %v306
    %475 = vmatpush.msra.mxu0 %v304
    %476 = vmatpush.msra.mxu0 %v302
    %477 = vmatpush.msra.mxu0 %v300
    %478 = vmatpush.msra.mxu0 %v298
    %479 = vmatpush.msra.mxu0 %v296
    %480 = vmatpush.msra.mxu0 %v294
    %481 = vmatpush.msra.mxu0 %v292
    %482 = vmatpush.msra.mxu0 %v290
    %483 = vmatpush.msra.mxu0 %v288
    %484 = vmatpush.msra.mxu0 %v286
    %485 = vmatpush.msra.mxu0 %v284
    %486 = vmatpush.msra.mxu0 %v282
    %487 = vmatpush.msra.mxu0 %v280
    %488 = vmatpush.msra.mxu0 %v278
    %489 = vmatpush.msra.mxu0 %v276
    %490 = vmatmul.f32.gmra.mxu0 %v174
    %v491 = vpop.f32.mrf.mxu0
    %v492 = vadd.f32 %v469, %v491
    %493 = vmatmul.f32.gmra.mxu0 %v178
    %v494 = vpop.f32.mrf.mxu0
    %v495 = vadd.f32 %v472, %v494
    %496 = vdwg.mxu0
    %v497 = vmax.f32 %v400, 0.0
    %v498 = vmax.f32 %v492, 0.0
    %v499 = vmax.f32 %v403, 0.0
    %v500 = vmax.f32 %v495, 0.0
    %v501 = vld [vmem:[%s5] sm:$0xff]
    %v502 = vld [vmem:[%s5 + $0x8] sm:$0xff]
    %v503 = vld [vmem:[%s5 + $0x10] sm:$0xff]
    %v504 = vld [vmem:[%s5 + $0x18] sm:$0xff]
    %v505 = vld [vmem:[%s5 + $0x20] sm:$0xff]
    %v506 = vld [vmem:[%s5 + $0x28] sm:$0xff]
    %v507 = vld [vmem:[%s5 + $0x30] sm:$0xff]
    %v508 = vld [vmem:[%s5 + $0x38] sm:$0xff]
    %v509 = vld [vmem:[%s5 + $0x40] sm:$0xff]
    %v510 = vld [vmem:[%s5 + $0x48] sm:$0xff]
    %v511 = vld [vmem:[%s5 + $0x50] sm:$0xff]
    %v512 = vld [vmem:[%s5 + $0x58] sm:$0xff]
    %v513 = vld [vmem:[%s5 + $0x60] sm:$0xff]
    %v514 = vld [vmem:[%s5 + $0x68] sm:$0xff]
    %v515 = vld [vmem:[%s5 + $0x70] sm:$0xff]
    %v516 = vld [vmem:[%s5 + $0x78] sm:$0xff]
    %v517 = vld [vmem:[%s5 + $0x80] sm:$0xff]
    %v518 = vld [vmem:[%s5 + $0x88] sm:$0xff]
    %v519 = vld [vmem:[%s5 + $0x90] sm:$0xff]
    %v520 = vld [vmem:[%s5 + $0x98] sm:$0xff]
    %v521 = vld [vmem:[%s5 + $0xa0] sm:$0xff]
    %v522 = vld [vmem:[%s5 + $0xa8] sm:$0xff]
    %v523 = vld [vmem:[%s5 + $0xb0] sm:$0xff]
    %v524 = vld [vmem:[%s5 + $0xb8] sm:$0xff]
    %v525 = vld [vmem:[%s5 + $0xc0] sm:$0xff]
    %v526 = vld [vmem:[%s5 + $0xc8] sm:$0xff]
    %v527 = vld [vmem:[%s5 + $0xd0] sm:$0xff]
    %v528 = vld [vmem:[%s5 + $0xd8] sm:$0xff]
    %v529 = vld [vmem:[%s5 + $0xe0] sm:$0xff]
    %v530 = vld [vmem:[%s5 + $0xe8] sm:$0xff]
    %v531 = vld [vmem:[%s5 + $0xf0] sm:$0xff]
    %v532 = vld [vmem:[%s5 + $0xf8] sm:$0xff]
    %v533 = vld [vmem:[#allocation2] sm:$0x1]
    %v535 = vperm.slane %v533, 0
    %537 = vmatpush.msra.mxu0 %v516
    %538 = vmatpush.msra.mxu0 %v515
    %539 = vmatpush.msra.mxu0 %v514
    %540 = vmatpush.msra.mxu0 %v513
    %541 = vmatpush.msra.mxu0 %v512
    %542 = vmatpush.msra.mxu0 %v511
    %543 = vmatpush.msra.mxu0 %v510
    %544 = vmatpush.msra.mxu0 %v509
    %545 = vmatpush.msra.mxu0 %v508
    %546 = vmatpush.msra.mxu0 %v507
    %547 = vmatpush.msra.mxu0 %v506
    %548 = vmatpush.msra.mxu0 %v505
    %549 = vmatpush.msra.mxu0 %v504
    %550 = vmatpush.msra.mxu0 %v503
    %551 = vmatpush.msra.mxu0 %v502
    %552 = vmatpush.msra.mxu0 %v501
    %553 = vmatmul.f32.gmra.mxu0 %v497
    %v554 = vpop.f32.mrf.mxu0
    %v555 = vadd.f32 %v535, %v554
    %556 = vmatmul.f32.gmra.mxu0 %v499
    %v557 = vpop.f32.mrf.mxu0
    %v558 = vadd.f32 %v535, %v557
    %559 = vdwg.mxu0
    %560 = vmatpush.msra.mxu0 %v532
    %561 = vmatpush.msra.mxu0 %v531
    %562 = vmatpush.msra.mxu0 %v530
    %563 = vmatpush.msra.mxu0 %v529
    %564 = vmatpush.msra.mxu0 %v528
    %565 = vmatpush.msra.mxu0 %v527
    %566 = vmatpush.msra.mxu0 %v526
    %567 = vmatpush.msra.mxu0 %v525
    %568 = vmatpush.msra.mxu0 %v524
    %569 = vmatpush.msra.mxu0 %v523
    %570 = vmatpush.msra.mxu0 %v522
    %571 = vmatpush.msra.mxu0 %v521
    %572 = vmatpush.msra.mxu0 %v520
    %573 = vmatpush.msra.mxu0 %v519
    %574 = vmatpush.msra.mxu0 %v518
    %575 = vmatpush.msra.mxu0 %v517
    %576 = vmatmul.f32.gmra.mxu0 %v498
    %v577 = vpop.f32.mrf.mxu0
    %v578 = vadd.f32 %v555, %v577
    %579 = vmatmul.f32.gmra.mxu0 %v500
    %v580 = vpop.f32.mrf.mxu0
    %v581 = vadd.f32 %v558, %v580
    %582 = vdwg.mxu0
    %v583 = vxor.u32 %v578, 2147483648
    %v584 = vxor.u32 %v581, 2147483648
    %v585 = vmul.f32 %v583, 1.442695
    %v586 = vpow.pop %v585
    %v587 = vmul.f32 %v584, 1.442695
    %v588 = vpow.pop %v587
    %v589 = vadd.f32 %v586, 1.0
    %v590 = vadd.f32 %v588, 1.0
    %v591 = vrcp.pop %v589
    %v592 = vmul.f32 %v589, %v591
    %v593 = vsub.f32 1.0, %v592
    %v594 = vmul.f32 %v591, %v593
    %v595 = vadd.f32 %v591, %v594
    %vm596 = vweird.f32 %v589
    %vm597 = vweird.f32 %v591
    %vm598 = vmor %vm596, %vm597
    %v599 = vsel %vm598, %v591, %v595
    %v600 = vand.u32 2147483647, %v589
    %vm601 = vcmp.eq.f32.partialorder %v600, 8.507059e+37
    %v602 = vand.u32 %v589, 2147483648
    %v603 = vor.u32 1.1754944e-38, %v602
    %v604 = vsel %vm601, %v603, %v599
    %v605 = vmul.f32 1.0, %v604
    %v606 = vrcp.pop %v590
    %v607 = vmul.f32 %v590, %v606
    %v608 = vsub.f32 1.0, %v607
    %v609 = vmul.f32 %v606, %v608
    %v610 = vadd.f32 %v606, %v609
    %vm611 = vweird.f32 %v590
    %vm612 = vweird.f32 %v606
    %vm613 = vmor %vm611, %vm612
    %v614 = vsel %vm613, %v606, %v610
    %v615 = vand.u32 2147483647, %v590
    %vm616 = vcmp.eq.f32.partialorder %v615, 8.507059e+37
    %v617 = vand.u32 %v590, 2147483648
    %v618 = vor.u32 1.1754944e-38, %v617
    %v619 = vsel %vm616, %v618, %v614
    %v620 = vmul.f32 1.0, %v619
    %vm621 = vcmask 7168
    %622 = vst.msk [vmem:[%s7] sm:$0xff] %vm621, %v605
    %623 = vst.msk [vmem:[%s7 + $0x8] sm:$0xff] %vm621, %v620
    // Predicated region
    $region34: #{tpu_custom_call.1} parent=1 // pred_check
      _
    $region35: #{tpu_custom_call.1} parent=1 // pred_check_branch
      %625 = sbr.rel (0) target = $region37
    $region36: #{tpu_custom_call.1} parent=1 // pred_region
      _
    $region37: #{tpu_custom_call.1} parent=1 // pred_fallthru
      _
    // Predicated region
    $region38: #{tpu_custom_call.1} parent=1 // pred_check
      _
    $region39: #{tpu_custom_call.1} parent=1 // pred_check_branch
      %627 = sbr.rel (0) target = $region41
    $region40: #{tpu_custom_call.1} parent=1 // pred_region
      _
    $region41: #{tpu_custom_call.1} parent=1 // pred_fallthru
      _
    %628 = vsyncpa [#allocation4], 1

</llo_original>
